<compile_context>
chip_gen: v6e
topology: v6e:2x2x1
jax: 0.10.0
libtpu: 0.0.40
codegen_flags: <defaults>
</compile_context>

<pallas_src>
import jax
import jax.numpy as jnp
from jax.experimental import pallas as pl
from jax.experimental.pallas import tpu as pltpu


C_IN = 896
C_HID = 224
# Safe on all generations: double-buffered x+out tiles at TM=512 f32 are
# ~7 MiB, + ~1.6 MiB weights  -> fits v5e's 16 MiB scoped default and leaves
# plenty of headroom on v7x's 64 MiB physical VMEM.
TM_DEFAULT = 512


def _se_mlp_kernel(x_ref, w1_ref, b1_ref, w2_ref, b2_ref, o_ref):
    # x_ref:  [TM, 896] (f32)    w1_ref: [896, 224]   b1_ref: [1, 224]
    # w2_ref: [224, 896]         b2_ref: [1, 896]     o_ref:  [TM, 896]
    x = x_ref[...]
    h = jnp.dot(x, w1_ref[...], preferred_element_type=jnp.float32) + b1_ref[...]
    h = jnp.maximum(h, 0.0)  # ReLU
    y = jnp.dot(h, w2_ref[...], preferred_element_type=jnp.float32) + b2_ref[...]
    o_ref[...] = y.astype(o_ref.dtype)


def prepare_params(w1, b1, w2, b2):
    """One-time parameter prep (hoisted out of the per-call path):
    conv weights -> [in, out] matmul layout, biases -> [1, out] rows."""
    w1_t = jnp.transpose(w1.reshape(C_HID, C_IN), (1, 0))  # [896, 224]
    w2_t = jnp.transpose(w2.reshape(C_IN, C_HID), (1, 0))  # [224, 896]
    b1_r = b1.reshape(1, C_HID)
    b2_r = b2.reshape(1, C_IN)
    # TODO(synk): optionally cast w1_t/w2_t (and x inside the kernel) to bf16 to
    # halve weight HBM traffic for the batch-1 DMA-bound case; kept f32 here to
    # match PyTorch Conv2d numerics exactly.
    return w1_t, b1_r, w2_t, b2_r


def se_mlp(x_nchw, w1_t, b1_r, w2_t, b2_r, *, tm=TM_DEFAULT):
    """Conv2d(896->224,1x1) -> ReLU -> Conv2d(224->896,1x1) on NCHW input (H=W=1)."""
    n, c_in, h, w = x_nchw.shape
    assert c_in == C_IN and h == 1 and w == 1
    m = n * h * w
    x2d = x_nchw.reshape(m, C_IN)

    tm = min(tm, m)  # small-batch path: single full-array block
    grid = (pl.cdiv(m, tm),)

    out2d = pl.pallas_call(
        _se_mlp_kernel,
        out_shape=jax.ShapeDtypeStruct((m, C_IN), x2d.dtype),
        grid_spec=pltpu.PrefetchScalarGridSpec(
            num_scalar_prefetch=0,
            grid=grid,
            in_specs=[
                pl.BlockSpec((tm, C_IN), lambda i: (i, 0)),      # x: tiled over M
                pl.BlockSpec((C_IN, C_HID), lambda i: (0, 0)),   # w1: resident
                pl.BlockSpec((1, C_HID), lambda i: (0, 0)),      # b1: resident
                pl.BlockSpec((C_HID, C_IN), lambda i: (0, 0)),   # w2: resident
                pl.BlockSpec((1, C_IN), lambda i: (0, 0)),       # b2: resident
            ],
            out_specs=pl.BlockSpec((tm, C_IN), lambda i: (i, 0)),
        ),
        compiler_params=pltpu.CompilerParams(
            dimension_semantics=("parallel",),        # M rows are independent
            vmem_limit_bytes=32 * 1024 * 1024,
        ),
    )(x2d, w1_t, b1_r, w2_t, b2_r)

    return out2d.reshape(n, C_IN, 1, 1)


def _init_params(key):
    # Deterministic, PyTorch-Conv2d-like init (uniform(-b, b), b = 1/sqrt(fan_in)).
    k1, k2, k3, k4 = jax.random.split(key, 4)
    bound1 = 1.0 / jnp.sqrt(float(C_IN))
    bound2 = 1.0 / jnp.sqrt(float(C_HID))
    w1 = jax.random.uniform(k1, (C_HID, C_IN, 1, 1), jnp.float32, -bound1, bound1)
    b1 = jax.random.uniform(k2, (C_HID,), jnp.float32, -bound1, bound1)
    w2 = jax.random.uniform(k3, (C_IN, C_HID, 1, 1), jnp.float32, -bound2, bound2)
    b2 = jax.random.uniform(k4, (C_IN,), jnp.float32, -bound2, bound2)
    return w1, b1, w2, b2


if __name__ == "__main__":
    key = jax.random.PRNGKey(0)
    kx, kp = jax.random.split(key)
    w1, b1, w2, b2 = _init_params(kp)
    params = prepare_params(w1, b1, w2, b2)

    def ref_fn(x):
        r = x.reshape(-1, C_IN) @ jnp.transpose(w1.reshape(C_HID, C_IN)) + b1
        r = jnp.maximum(r, 0.0)
        r = r @ jnp.transpose(w2.reshape(C_IN, C_HID)) + b2
        return r.reshape(x.shape[0], C_IN, 1, 1)

    # 1) module-spec shape: [1, 896, 1, 1]
    x1 = jax.random.normal(kx, (1, C_IN, 1, 1), dtype=jnp.float32)
    out1 = jax.block_until_ready(se_mlp(x1, *params))
    assert out1.shape == (1, C_IN, 1, 1), out1.shape
    assert jnp.allclose(out1, ref_fn(x1), atol=1e-3, rtol=1e-3)

    # 2) multi-tile path (grid of 2 with a partial last tile at TM=512)
    x2 = jax.random.normal(jax.random.PRNGKey(1), (640, C_IN, 1, 1), dtype=jnp.float32)
    out2 = jax.block_until_ready(se_mlp(x2, *params))
    assert out2.shape == (640, C_IN, 1, 1), out2.shape
    assert jnp.allclose(out2, ref_fn(x2), atol=1e-3, rtol=1e-3)

    print("KERNEL_OK")
</pallas_src>

<mosaic_0001>
module attributes {stable_mosaic.version = 11 : i64} {
  func.func @_se_mlp_kernel(%arg0: i32, %arg1: memref<1x896xf32, #tpu.memory_space<vmem>>, %arg2: memref<896x224xf32, #tpu.memory_space<vmem>>, %arg3: memref<1x224xf32, #tpu.memory_space<vmem>>, %arg4: memref<224x896xf32, #tpu.memory_space<vmem>>, %arg5: memref<1x896xf32, #tpu.memory_space<vmem>>, %arg6: memref<1x896xf32, #tpu.memory_space<vmem>>) attributes {dimension_semantics = [#tpu.dimension_semantics<parallel>], iteration_bounds = array<i64: 1>, scalar_prefetch = 0 : i64, scratch_operands = 0 : i64, tpu.core_type = #tpu.core_type<tc>, window_params = [{transform_indices = @transform_0, window_bounds = array<i64: 1, 896>}, {pipeline_mode = #tpu.pipeline_mode<synchronous>, transform_indices = @transform_1, window_bounds = array<i64: 896, 224>}, {pipeline_mode = #tpu.pipeline_mode<synchronous>, transform_indices = @transform_2, window_bounds = array<i64: 1, 224>}, {pipeline_mode = #tpu.pipeline_mode<synchronous>, transform_indices = @transform_3, window_bounds = array<i64: 224, 896>}, {pipeline_mode = #tpu.pipeline_mode<synchronous>, transform_indices = @transform_4, window_bounds = array<i64: 1, 896>}, {transform_indices = @transform_5, window_bounds = array<i64: 1, 896>}]} {
    %c0 = arith.constant 0 : index
    %c0_0 = arith.constant 0 : index
    %0 = vector.load %arg1[%c0, %c0_0] : memref<1x896xf32, #tpu.memory_space<vmem>>, vector<1x896xf32>
    %c0_1 = arith.constant 0 : index
    %c0_2 = arith.constant 0 : index
    %1 = vector.load %arg2[%c0_1, %c0_2] : memref<896x224xf32, #tpu.memory_space<vmem>>, vector<896x224xf32>
    %cst = arith.constant dense<0.000000e+00> : vector<1x224xf32>
    %2 = tpu.matmul %0, %1, %cst {dimension_numbers = #tpu.dot_dimension_numbers<[1], [0], [0], [1], [0, 0, 1, 1], [], []>} : vector<1x896xf32>, vector<896x224xf32>, vector<1x224xf32> -> vector<1x224xf32>
    %c0_3 = arith.constant 0 : index
    %c0_4 = arith.constant 0 : index
    %3 = vector.load %arg3[%c0_3, %c0_4] : memref<1x224xf32, #tpu.memory_space<vmem>>, vector<1x224xf32>
    %4 = arith.addf %2, %3 : vector<1x224xf32>
    %cst_5 = arith.constant 0.000000e+00 : f32
    %5 = vector.broadcast %cst_5 : f32 to vector<1x224xf32>
    %6 = arith.maximumf %4, %5 : vector<1x224xf32>
    %c0_6 = arith.constant 0 : index
    %c0_7 = arith.constant 0 : index
    %7 = vector.load %arg4[%c0_6, %c0_7] : memref<224x896xf32, #tpu.memory_space<vmem>>, vector<224x896xf32>
    %cst_8 = arith.constant dense<0.000000e+00> : vector<1x896xf32>
    %8 = tpu.matmul %6, %7, %cst_8 {dimension_numbers = #tpu.dot_dimension_numbers<[1], [0], [0], [1], [0, 0, 1, 1], [], []>} : vector<1x224xf32>, vector<224x896xf32>, vector<1x896xf32> -> vector<1x896xf32>
    %c0_9 = arith.constant 0 : index
    %c0_10 = arith.constant 0 : index
    %9 = vector.load %arg5[%c0_9, %c0_10] : memref<1x896xf32, #tpu.memory_space<vmem>>, vector<1x896xf32>
    %10 = arith.addf %8, %9 : vector<1x896xf32>
    %c0_11 = arith.constant 0 : index
    %c0_12 = arith.constant 0 : index
    %11 = vector.load %arg6[%c0_11, %c0_12] : memref<1x896xf32, #tpu.memory_space<vmem>>, vector<1x896xf32>
    tpu.vector_store %arg6[%c0_11, %c0_12], %10 {strides = array<i32>} : memref<1x896xf32, #tpu.memory_space<vmem>>, vector<1x896xf32>,
    return
  }
  func.func @transform_0(%arg0: i32) -> (i32, i32) {
    %c0_i32 = arith.constant 0 : i32
    %c0_i32_0 = arith.constant 0 : i32
    return %arg0, %c0_i32 : i32, i32
  }
  func.func @transform_1(%arg0: i32) -> (i32, i32) {
    %c0_i32 = arith.constant 0 : i32
    %c0_i32_0 = arith.constant 0 : i32
    %c0_i32_1 = arith.constant 0 : i32
    return %c0_i32, %c0_i32_0 : i32, i32
  }
  func.func @transform_2(%arg0: i32) -> (i32, i32) {
    %c0_i32 = arith.constant 0 : i32
    %c0_i32_0 = arith.constant 0 : i32
    %c0_i32_1 = arith.constant 0 : i32
    return %c0_i32, %c0_i32_0 : i32, i32
  }
  func.func @transform_3(%arg0: i32) -> (i32, i32) {
    %c0_i32 = arith.constant 0 : i32
    %c0_i32_0 = arith.constant 0 : i32
    %c0_i32_1 = arith.constant 0 : i32
    return %c0_i32, %c0_i32_0 : i32, i32
  }
  func.func @transform_4(%arg0: i32) -> (i32, i32) {
    %c0_i32 = arith.constant 0 : i32
    %c0_i32_0 = arith.constant 0 : i32
    %c0_i32_1 = arith.constant 0 : i32
    return %c0_i32, %c0_i32_0 : i32, i32
  }
  func.func @transform_5(%arg0: i32) -> (i32, i32) {
    %c0_i32 = arith.constant 0 : i32
    %c0_i32_0 = arith.constant 0 : i32
    return %arg0, %c0_i32 : i32, i32
  }
}

</mosaic_0001>

<llo_original>
// kernel: tpu_custom_call.1
$region0: #{tpu_custom_call.1}
  #allocation0 [shape = 'u32[]', space=smem, size = 0x4, offset = 0x4, fixed_abs, tag = 'smem constant byte address 0x4 - core index']
  #allocation1 [shape = 'u32[144,128]{1,0:T(1,128)}', space=vmem, size = 0x12000, scoped, tag = 'internal scratch']
  %s0 = inlined_call_operand.vmem [shape: f32[1,896], index: 0, kind: input, shape index: {}]
  %s1 = inlined_call_operand.vmem [shape: f32[896,224], index: 1, kind: input, shape index: {}]
  %s2 = inlined_call_operand.vmem [shape: f32[1,224], index: 2, kind: input, shape index: {}]
  %s3 = inlined_call_operand.vmem [shape: f32[224,896], index: 3, kind: input, shape index: {}]
  %s4 = inlined_call_operand.vmem [shape: f32[1,896], index: 4, kind: input, shape index: {}]
  %s5 = inlined_call_operand.hbm [shape: f32[1,896], index: 5, kind: output, shape index: {}]
  %s6 = sld [smem:[#allocation0]]
  $region30: #{tpu_custom_call.1} parent=0
    _
  %s8 = ssub.s32 1, %s6
  %s9 = scalar_select 0, %s8, %s6
  $region1: #{tpu_custom_call.1} parent=0
    #allocation2 [shape = 'u8[3584]{0}', space=vmem, size = 0x1000, scoped, tag = 'output window, operand 0, single buffered']
    #allocation3 [shape = 's32[1]{0}', space=sflag, size = 0x4, scoped, tag = 'scoped memory for tpu_custom_call.1']
    %10 = vsyncpa [#allocation3], 0
    // Predicated region
    $region2: #{tpu_custom_call.1} parent=1 // pred_check
      _
    $region3: #{tpu_custom_call.1} parent=1 // pred_check_branch
      %12 = sbr.rel (0) target = $region5
    $region4: #{tpu_custom_call.1} parent=1 // pred_region
      _
    $region5: #{tpu_custom_call.1} parent=1 // pred_fallthru
      _
    // Predicated region
    $region6: #{tpu_custom_call.1} parent=1 // pred_check
      _
    $region7: #{tpu_custom_call.1} parent=1 // pred_check_branch
      %14 = sbr.rel (0) target = $region9
    $region8: #{tpu_custom_call.1} parent=1 // pred_region
      _
    $region9: #{tpu_custom_call.1} parent=1 // pred_fallthru
      _
    // Predicated region
    $region10: #{tpu_custom_call.1} parent=1 // pred_check
      _
    $region11: #{tpu_custom_call.1} parent=1 // pred_check_branch
      %16 = sbr.rel (0) target = $region13
    $region12: #{tpu_custom_call.1} parent=1 // pred_region
      _
    $region13: #{tpu_custom_call.1} parent=1 // pred_fallthru
      _
    // Predicated region
    $region14: #{tpu_custom_call.1} parent=1 // pred_check
      _
    $region15: #{tpu_custom_call.1} parent=1 // pred_check_branch
      %18 = sbr.rel (0) target = $region17
    $region16: #{tpu_custom_call.1} parent=1 // pred_region
      _
    $region17: #{tpu_custom_call.1} parent=1 // pred_fallthru
      _
    // Predicated region
    $region18: #{tpu_custom_call.1} parent=1 // pred_check
      _
    $region19: #{tpu_custom_call.1} parent=1 // pred_check_branch
      %20 = sbr.rel (0) target = $region21
    $region20: #{tpu_custom_call.1} parent=1 // pred_region
      _
    $region21: #{tpu_custom_call.1} parent=1 // pred_fallthru
      _
    %v21 = vld [vmem:[%s0] sm:$0xff]
    %v22 = vld [vmem:[%s1] sm:$0xff]
    %v23 = vld [vmem:[%s1 + $0x8] sm:$0xff]
    %v24 = vld [vmem:[%s1 + $0x10] sm:$0xff]
    %v25 = vld [vmem:[%s1 + $0x18] sm:$0xff]
    %v26 = vld [vmem:[%s1 + $0x20] sm:$0xff]
    %v27 = vld [vmem:[%s1 + $0x28] sm:$0xff]
    %v28 = vld [vmem:[%s1 + $0x30] sm:$0xff]
    %v29 = vld [vmem:[%s1 + $0x38] sm:$0xff]
    %v30 = vld [vmem:[%s1 + $0x40] sm:$0xff]
    %v31 = vld [vmem:[%s1 + $0x48] sm:$0xff]
    %v32 = vld [vmem:[%s1 + $0x50] sm:$0xff]
    %v33 = vld [vmem:[%s1 + $0x58] sm:$0xff]
    %v34 = vld [vmem:[%s1 + $0x60] sm:$0xff]
    %v35 = vld [vmem:[%s1 + $0x68] sm:$0xff]
    %v36 = vld [vmem:[%s1 + $0x70] sm:$0xff]
    %v37 = vld [vmem:[%s1 + $0x78] sm:$0xff]
    %v38 = vld [vmem:[%s1 + $0x80] sm:$0xff]
    %v39 = vld [vmem:[%s1 + $0x88] sm:$0xff]
    %v40 = vld [vmem:[%s1 + $0x90] sm:$0xff]
    %v41 = vld [vmem:[%s1 + $0x98] sm:$0xff]
    %v42 = vld [vmem:[%s1 + $0xa0] sm:$0xff]
    %v43 = vld [vmem:[%s1 + $0xa8] sm:$0xff]
    %v44 = vld [vmem:[%s1 + $0xb0] sm:$0xff]
    %v45 = vld [vmem:[%s1 + $0xb8] sm:$0xff]
    %v46 = vld [vmem:[%s1 + $0xc0] sm:$0xff]
    %v47 = vld [vmem:[%s1 + $0xc8] sm:$0xff]
    %v48 = vld [vmem:[%s1 + $0xd0] sm:$0xff]
    %v49 = vld [vmem:[%s1 + $0xd8] sm:$0xff]
    %v50 = vld [vmem:[%s1 + $0xe0] sm:$0xff]
    %v51 = vld [vmem:[%s1 + $0xe8] sm:$0xff]
    %v52 = vld [vmem:[%s1 + $0xf0] sm:$0xff]
    %v53 = vld [vmem:[%s1 + $0xf8] sm:$0xff]
    %v54 = vld [vmem:[%s1 + $0x100] sm:$0xff]
    %v55 = vld [vmem:[%s1 + $0x108] sm:$0xff]
    %v56 = vld [vmem:[%s1 + $0x110] sm:$0xff]
    %v57 = vld [vmem:[%s1 + $0x118] sm:$0xff]
    %v58 = vld [vmem:[%s1 + $0x120] sm:$0xff]
    %v59 = vld [vmem:[%s1 + $0x128] sm:$0xff]
    %v60 = vld [vmem:[%s1 + $0x130] sm:$0xff]
    %v61 = vld [vmem:[%s1 + $0x138] sm:$0xff]
    %v62 = vld [vmem:[%s1 + $0x140] sm:$0xff]
    %v63 = vld [vmem:[%s1 + $0x148] sm:$0xff]
    %v64 = vld [vmem:[%s1 + $0x150] sm:$0xff]
    %v65 = vld [vmem:[%s1 + $0x158] sm:$0xff]
    %v66 = vld [vmem:[%s1 + $0x160] sm:$0xff]
    %v67 = vld [vmem:[%s1 + $0x168] sm:$0xff]
    %v68 = vld [vmem:[%s1 + $0x170] sm:$0xff]
    %v69 = vld [vmem:[%s1 + $0x178] sm:$0xff]
    %v70 = vld [vmem:[%s1 + $0x180] sm:$0xff]
    %v71 = vld [vmem:[%s1 + $0x188] sm:$0xff]
    %v72 = vld [vmem:[%s1 + $0x190] sm:$0xff]
    %v73 = vld [vmem:[%s1 + $0x198] sm:$0xff]
    %v74 = vld [vmem:[%s1 + $0x1a0] sm:$0xff]
    %v75 = vld [vmem:[%s1 + $0x1a8] sm:$0xff]
    %v76 = vld [vmem:[%s1 + $0x1b0] sm:$0xff]
    %v77 = vld [vmem:[%s1 + $0x1b8] sm:$0xff]
    %v78 = vld [vmem:[%s1 + $0x1c0] sm:$0xff]
    %v79 = vld [vmem:[%s1 + $0x1c8] sm:$0xff]
    %v80 = vld [vmem:[%s1 + $0x1d0] sm:$0xff]
    %v81 = vld [vmem:[%s1 + $0x1d8] sm:$0xff]
    %v82 = vld [vmem:[%s1 + $0x1e0] sm:$0xff]
    %v83 = vld [vmem:[%s1 + $0x1e8] sm:$0xff]
    %v84 = vld [vmem:[%s1 + $0x1f0] sm:$0xff]
    %v85 = vld [vmem:[%s1 + $0x1f8] sm:$0xff]
    %v86 = vld [vmem:[%s1 + $0x200] sm:$0xff]
    %v87 = vld [vmem:[%s1 + $0x208] sm:$0xff]
    %v88 = vld [vmem:[%s1 + $0x210] sm:$0xff]
    %v89 = vld [vmem:[%s1 + $0x218] sm:$0xff]
    %v90 = vld [vmem:[%s1 + $0x220] sm:$0xff]
    %v91 = vld [vmem:[%s1 + $0x228] sm:$0xff]
    %v92 = vld [vmem:[%s1 + $0x230] sm:$0xff]
    %v93 = vld [vmem:[%s1 + $0x238] sm:$0xff]
    %v94 = vld [vmem:[%s1 + $0x240] sm:$0xff]
    %v95 = vld [vmem:[%s1 + $0x248] sm:$0xff]
    %v96 = vld [vmem:[%s1 + $0x250] sm:$0xff]
    %v97 = vld [vmem:[%s1 + $0x258] sm:$0xff]
    %v98 = vld [vmem:[%s1 + $0x260] sm:$0xff]
    %v99 = vld [vmem:[%s1 + $0x268] sm:$0xff]
    %v100 = vld [vmem:[%s1 + $0x270] sm:$0xff]
    %v101 = vld [vmem:[%s1 + $0x278] sm:$0xff]
    %v102 = vld [vmem:[%s1 + $0x280] sm:$0xff]
    %v103 = vld [vmem:[%s1 + $0x288] sm:$0xff]
    %v104 = vld [vmem:[%s1 + $0x290] sm:$0xff]
    %v105 = vld [vmem:[%s1 + $0x298] sm:$0xff]
    %v106 = vld [vmem:[%s1 + $0x2a0] sm:$0xff]
    %v107 = vld [vmem:[%s1 + $0x2a8] sm:$0xff]
    %v108 = vld [vmem:[%s1 + $0x2b0] sm:$0xff]
    %v109 = vld [vmem:[%s1 + $0x2b8] sm:$0xff]
    %v110 = vld [vmem:[%s1 + $0x2c0] sm:$0xff]
    %v111 = vld [vmem:[%s1 + $0x2c8] sm:$0xff]
    %v112 = vld [vmem:[%s1 + $0x2d0] sm:$0xff]
    %v113 = vld [vmem:[%s1 + $0x2d8] sm:$0xff]
    %v114 = vld [vmem:[%s1 + $0x2e0] sm:$0xff]
    %v115 = vld [vmem:[%s1 + $0x2e8] sm:$0xff]
    %v116 = vld [vmem:[%s1 + $0x2f0] sm:$0xff]
    %v117 = vld [vmem:[%s1 + $0x2f8] sm:$0xff]
    %v118 = vld [vmem:[%s1 + $0x300] sm:$0xff]
    %v119 = vld [vmem:[%s1 + $0x308] sm:$0xff]
    %v120 = vld [vmem:[%s1 + $0x310] sm:$0xff]
    %v121 = vld [vmem:[%s1 + $0x318] sm:$0xff]
    %v122 = vld [vmem:[%s1 + $0x320] sm:$0xff]
    %v123 = vld [vmem:[%s1 + $0x328] sm:$0xff]
    %v124 = vld [vmem:[%s1 + $0x330] sm:$0xff]
    %v125 = vld [vmem:[%s1 + $0x338] sm:$0xff]
    %v126 = vld [vmem:[%s1 + $0x340] sm:$0xff]
    %v127 = vld [vmem:[%s1 + $0x348] sm:$0xff]
    %v128 = vld [vmem:[%s1 + $0x350] sm:$0xff]
    %v129 = vld [vmem:[%s1 + $0x358] sm:$0xff]
    %v130 = vld [vmem:[%s1 + $0x360] sm:$0xff]
    %v131 = vld [vmem:[%s1 + $0x368] sm:$0xff]
    %v132 = vld [vmem:[%s1 + $0x370] sm:$0xff]
    %v133 = vld [vmem:[%s1 + $0x378] sm:$0xff]
    %v134 = vld [vmem:[%s1 + $0x380] sm:$0xff]
    %v135 = vld [vmem:[%s1 + $0x388] sm:$0xff]
    %v136 = vld [vmem:[%s1 + $0x390] sm:$0xff]
    %v137 = vld [vmem:[%s1 + $0x398] sm:$0xff]
    %v138 = vld [vmem:[%s1 + $0x3a0] sm:$0xff]
    %v139 = vld [vmem:[%s1 + $0x3a8] sm:$0xff]
    %v140 = vld [vmem:[%s1 + $0x3b0] sm:$0xff]
    %v141 = vld [vmem:[%s1 + $0x3b8] sm:$0xff]
    %v142 = vld [vmem:[%s1 + $0x3c0] sm:$0xff]
    %v143 = vld [vmem:[%s1 + $0x3c8] sm:$0xff]
    %v144 = vld [vmem:[%s1 + $0x3d0] sm:$0xff]
    %v145 = vld [vmem:[%s1 + $0x3d8] sm:$0xff]
    %v146 = vld [vmem:[%s1 + $0x3e0] sm:$0xff]
    %v147 = vld [vmem:[%s1 + $0x3e8] sm:$0xff]
    %v148 = vld [vmem:[%s1 + $0x3f0] sm:$0xff]
    %v149 = vld [vmem:[%s1 + $0x3f8] sm:$0xff]
    %v150 = vld [vmem:[%s1 + $0x400] sm:$0xff]
    %v151 = vld [vmem:[%s1 + $0x408] sm:$0xff]
    %v152 = vld [vmem:[%s1 + $0x410] sm:$0xff]
    %v153 = vld [vmem:[%s1 + $0x418] sm:$0xff]
    %v154 = vld [vmem:[%s1 + $0x420] sm:$0xff]
    %v155 = vld [vmem:[%s1 + $0x428] sm:$0xff]
    %v156 = vld [vmem:[%s1 + $0x430] sm:$0xff]
    %v157 = vld [vmem:[%s1 + $0x438] sm:$0xff]
    %v158 = vld [vmem:[%s1 + $0x440] sm:$0xff]
    %v159 = vld [vmem:[%s1 + $0x448] sm:$0xff]
    %v160 = vld [vmem:[%s1 + $0x450] sm:$0xff]
    %v161 = vld [vmem:[%s1 + $0x458] sm:$0xff]
    %v162 = vld [vmem:[%s1 + $0x460] sm:$0xff]
    %v163 = vld [vmem:[%s1 + $0x468] sm:$0xff]
    %v164 = vld [vmem:[%s1 + $0x470] sm:$0xff]
    %v165 = vld [vmem:[%s1 + $0x478] sm:$0xff]
    %v166 = vld [vmem:[%s1 + $0x480] sm:$0xff]
    %v167 = vld [vmem:[%s1 + $0x488] sm:$0xff]
    %v168 = vld [vmem:[%s1 + $0x490] sm:$0xff]
    %v169 = vld [vmem:[%s1 + $0x498] sm:$0xff]
    %v170 = vld [vmem:[%s1 + $0x4a0] sm:$0xff]
    %v171 = vld [vmem:[%s1 + $0x4a8] sm:$0xff]
    %v172 = vld [vmem:[%s1 + $0x4b0] sm:$0xff]
    %v173 = vld [vmem:[%s1 + $0x4b8] sm:$0xff]
    %v174 = vld [vmem:[%s1 + $0x4c0] sm:$0xff]
    %v175 = vld [vmem:[%s1 + $0x4c8] sm:$0xff]
    %v176 = vld [vmem:[%s1 + $0x4d0] sm:$0xff]
    %v177 = vld [vmem:[%s1 + $0x4d8] sm:$0xff]
    %v178 = vld [vmem:[%s1 + $0x4e0] sm:$0xff]
    %v179 = vld [vmem:[%s1 + $0x4e8] sm:$0xff]
    %v180 = vld [vmem:[%s1 + $0x4f0] sm:$0xff]
    %v181 = vld [vmem:[%s1 + $0x4f8] sm:$0xff]
    %v182 = vld [vmem:[%s1 + $0x500] sm:$0xff]
    %v183 = vld [vmem:[%s1 + $0x508] sm:$0xff]
    %v184 = vld [vmem:[%s1 + $0x510] sm:$0xff]
    %v185 = vld [vmem:[%s1 + $0x518] sm:$0xff]
    %v186 = vld [vmem:[%s1 + $0x520] sm:$0xff]
    %v187 = vld [vmem:[%s1 + $0x528] sm:$0xff]
    %v188 = vld [vmem:[%s1 + $0x530] sm:$0xff]
    %v189 = vld [vmem:[%s1 + $0x538] sm:$0xff]
    %v190 = vld [vmem:[%s1 + $0x540] sm:$0xff]
    %v191 = vld [vmem:[%s1 + $0x548] sm:$0xff]
    %v192 = vld [vmem:[%s1 + $0x550] sm:$0xff]
    %v193 = vld [vmem:[%s1 + $0x558] sm:$0xff]
    %v194 = vld [vmem:[%s1 + $0x560] sm:$0xff]
    %v195 = vld [vmem:[%s1 + $0x568] sm:$0xff]
    %v196 = vld [vmem:[%s1 + $0x570] sm:$0xff]
    %v197 = vld [vmem:[%s1 + $0x578] sm:$0xff]
    %v198 = vld [vmem:[%s1 + $0x580] sm:$0xff]
    %v199 = vld [vmem:[%s1 + $0x588] sm:$0xff]
    %v200 = vld [vmem:[%s1 + $0x590] sm:$0xff]
    %v201 = vld [vmem:[%s1 + $0x598] sm:$0xff]
    %v202 = vld [vmem:[%s1 + $0x5a0] sm:$0xff]
    %v203 = vld [vmem:[%s1 + $0x5a8] sm:$0xff]
    %v204 = vld [vmem:[%s1 + $0x5b0] sm:$0xff]
    %v205 = vld [vmem:[%s1 + $0x5b8] sm:$0xff]
    %v206 = vld [vmem:[%s1 + $0x5c0] sm:$0xff]
    %v207 = vld [vmem:[%s1 + $0x5c8] sm:$0xff]
    %v208 = vld [vmem:[%s1 + $0x5d0] sm:$0xff]
    %v209 = vld [vmem:[%s1 + $0x5d8] sm:$0xff]
    %v210 = vld [vmem:[%s1 + $0x5e0] sm:$0xff]
    %v211 = vld [vmem:[%s1 + $0x5e8] sm:$0xff]
    %v212 = vld [vmem:[%s1 + $0x5f0] sm:$0xff]
    %v213 = vld [vmem:[%s1 + $0x5f8] sm:$0xff]
    %v214 = vld [vmem:[%s1 + $0x600] sm:$0xff]
    %v215 = vld [vmem:[%s1 + $0x608] sm:$0xff]
    %v216 = vld [vmem:[%s1 + $0x610] sm:$0xff]
    %v217 = vld [vmem:[%s1 + $0x618] sm:$0xff]
    %v218 = vld [vmem:[%s1 + $0x620] sm:$0xff]
    %v219 = vld [vmem:[%s1 + $0x628] sm:$0xff]
    %v220 = vld [vmem:[%s1 + $0x630] sm:$0xff]
    %v221 = vld [vmem:[%s1 + $0x638] sm:$0xff]
    %v222 = vld [vmem:[%s1 + $0x640] sm:$0xff]
    %v223 = vld [vmem:[%s1 + $0x648] sm:$0xff]
    %v224 = vld [vmem:[%s1 + $0x650] sm:$0xff]
    %v225 = vld [vmem:[%s1 + $0x658] sm:$0xff]
    %v226 = vld [vmem:[%s1 + $0x660] sm:$0xff]
    %v227 = vld [vmem:[%s1 + $0x668] sm:$0xff]
    %v228 = vld [vmem:[%s1 + $0x670] sm:$0xff]
    %v229 = vld [vmem:[%s1 + $0x678] sm:$0xff]
    %v230 = vld [vmem:[%s1 + $0x680] sm:$0xff]
    %v231 = vld [vmem:[%s1 + $0x688] sm:$0xff]
    %v232 = vld [vmem:[%s1 + $0x690] sm:$0xff]
    %v233 = vld [vmem:[%s1 + $0x698] sm:$0xff]
    %v234 = vld [vmem:[%s1 + $0x6a0] sm:$0xff]
    %v235 = vld [vmem:[%s1 + $0x6a8] sm:$0xff]
    %v236 = vld [vmem:[%s1 + $0x6b0] sm:$0xff]
    %v237 = vld [vmem:[%s1 + $0x6b8] sm:$0xff]
    %v238 = vld [vmem:[%s1 + $0x6c0] sm:$0xff]
    %v239 = vld [vmem:[%s1 + $0x6c8] sm:$0xff]
    %v240 = vld [vmem:[%s1 + $0x6d0] sm:$0xff]
    %v241 = vld [vmem:[%s1 + $0x6d8] sm:$0xff]
    %v242 = vld [vmem:[%s1 + $0x6e0] sm:$0xff]
    %v243 = vld [vmem:[%s1 + $0x6e8] sm:$0xff]
    %v244 = vld [vmem:[%s1 + $0x6f0] sm:$0xff]
    %v245 = vld [vmem:[%s1 + $0x6f8] sm:$0xff]
    %v246 = vld [vmem:[%s2] sm:$0x3]
    %v248 = vlaneseq
    %v249 = vshrl.u32 %v248, 7
    %v250 = vsub.s32 0, %v249
    %v251 = vrot.slane %v21, %v250
    %v252 = vlaneseq
    %v253 = vshrl.u32 %v252, 7
    %v254 = vsub.s32 1, %v253
    %v255 = vrot.slane %v21, %v254
    %v256 = vlaneseq
    %v257 = vshrl.u32 %v256, 7
    %v258 = vsub.s32 2, %v257
    %v259 = vrot.slane %v21, %v258
    %v260 = vlaneseq
    %v261 = vshrl.u32 %v260, 7
    %v262 = vsub.s32 3, %v261
    %v263 = vrot.slane %v21, %v262
    %v264 = vlaneseq
    %v265 = vshrl.u32 %v264, 7
    %v266 = vsub.s32 4, %v265
    %v267 = vrot.slane %v21, %v266
    %v268 = vlaneseq
    %v269 = vshrl.u32 %v268, 7
    %v270 = vsub.s32 5, %v269
    %v271 = vrot.slane %v21, %v270
    %v272 = vlaneseq
    %v273 = vshrl.u32 %v272, 7
    %v274 = vsub.s32 6, %v273
    %v275 = vrot.slane %v21, %v274
    %v284 = vlaneseq
    %v285 = vshrl.u32 %v284, 7
    %v286 = vsub.s32 0, %v285
    %v287 = vrot.slane %v246, %v286
    %v288 = vlaneseq
    %v289 = vshrl.u32 %v288, 7
    %v290 = vsub.s32 1, %v289
    %v291 = vrot.slane %v246, %v290
    %294 = vmatprep.subr.mxu0 %v53
    %295 = vmatpush1.msra.mxu0 %v52
    %296 = vmatprep.subr.mxu0 %v51
    %297 = vmatpush1.msra.mxu0 %v50
    %298 = vmatprep.subr.mxu0 %v49
    %299 = vmatpush1.msra.mxu0 %v48
    %300 = vmatprep.subr.mxu0 %v47
    %301 = vmatpush1.msra.mxu0 %v46
    %302 = vmatprep.subr.mxu0 %v45
    %303 = vmatpush1.msra.mxu0 %v44
    %304 = vmatprep.subr.mxu0 %v43
    %305 = vmatpush1.msra.mxu0 %v42
    %306 = vmatprep.subr.mxu0 %v41
    %307 = vmatpush1.msra.mxu0 %v40
    %308 = vmatprep.subr.mxu0 %v39
    %309 = vmatpush1.msra.mxu0 %v38
    %310 = vmatprep.subr.mxu0 %v37
    %311 = vmatpush1.msra.mxu0 %v36
    %312 = vmatprep.subr.mxu0 %v35
    %313 = vmatpush1.msra.mxu0 %v34
    %314 = vmatprep.subr.mxu0 %v33
    %315 = vmatpush1.msra.mxu0 %v32
    %316 = vmatprep.subr.mxu0 %v31
    %317 = vmatpush1.msra.mxu0 %v30
    %318 = vmatprep.subr.mxu0 %v29
    %319 = vmatpush1.msra.mxu0 %v28
    %320 = vmatprep.subr.mxu0 %v27
    %321 = vmatpush1.msra.mxu0 %v26
    %322 = vmatprep.subr.mxu0 %v25
    %323 = vmatpush1.msra.mxu0 %v24
    %324 = vmatprep.subr.mxu0 %v23
    %325 = vmatpush1.msra.mxu0 %v22
    %326 = vmatprep.subr.mxu0 %v85
    %327 = vmatpush2.msra.mxu0 %v84
    %328 = vmatprep.subr.mxu0 %v83
    %329 = vmatpush2.msra.mxu0 %v82
    %330 = vmatprep.subr.mxu0 %v81
    %331 = vmatpush2.msra.mxu0 %v80
    %332 = vmatprep.subr.mxu0 %v79
    %333 = vmatpush2.msra.mxu0 %v78
    %334 = vmatprep.subr.mxu0 %v77
    %335 = vmatpush2.msra.mxu0 %v76
    %336 = vmatprep.subr.mxu0 %v75
    %337 = vmatpush2.msra.mxu0 %v74
    %338 = vmatprep.subr.mxu0 %v73
    %339 = vmatpush2.msra.mxu0 %v72
    %340 = vmatprep.subr.mxu0 %v71
    %341 = vmatpush2.msra.mxu0 %v70
    %342 = vmatprep.subr.mxu0 %v69
    %343 = vmatpush2.msra.mxu0 %v68
    %344 = vmatprep.subr.mxu0 %v67
    %345 = vmatpush2.msra.mxu0 %v66
    %346 = vmatprep.subr.mxu0 %v65
    %347 = vmatpush2.msra.mxu0 %v64
    %348 = vmatprep.subr.mxu0 %v63
    %349 = vmatpush2.msra.mxu0 %v62
    %350 = vmatprep.subr.mxu0 %v61
    %351 = vmatpush2.msra.mxu0 %v60
    %352 = vmatprep.subr.mxu0 %v59
    %353 = vmatpush2.msra.mxu0 %v58
    %354 = vmatprep.subr.mxu0 %v57
    %355 = vmatpush2.msra.mxu0 %v56
    %356 = vmatprep.subr.mxu0 %v55
    %357 = vmatpush2.msra.mxu0 %v54
    %358 = vmatprep.mubr.f32.mxu0 %v255
    %359 = vmatmul.mubr.f32.gmra.mxu0 %v251
    %v360 = vpop.f32.mrf.mxu0
    %v361 = vadd.f32 %v287, %v360
    %v362 = vpop.f32.mrf.mxu0
    %v363 = vadd.f32 %v291, %v362
    %364 = vdwg.mxu0
    %365 = vmatprep.subr.mxu0 %v117
    %366 = vmatpush1.msra.mxu0 %v116
    %367 = vmatprep.subr.mxu0 %v115
    %368 = vmatpush1.msra.mxu0 %v114
    %369 = vmatprep.subr.mxu0 %v113
    %370 = vmatpush1.msra.mxu0 %v112
    %371 = vmatprep.subr.mxu0 %v111
    %372 = vmatpush1.msra.mxu0 %v110
    %373 = vmatprep.subr.mxu0 %v109
    %374 = vmatpush1.msra.mxu0 %v108
    %375 = vmatprep.subr.mxu0 %v107
    %376 = vmatpush1.msra.mxu0 %v106
    %377 = vmatprep.subr.mxu0 %v105
    %378 = vmatpush1.msra.mxu0 %v104
    %379 = vmatprep.subr.mxu0 %v103
    %380 = vmatpush1.msra.mxu0 %v102
    %381 = vmatprep.subr.mxu0 %v101
    %382 = vmatpush1.msra.mxu0 %v100
    %383 = vmatprep.subr.mxu0 %v99
    %384 = vmatpush1.msra.mxu0 %v98
    %385 = vmatprep.subr.mxu0 %v97
    %386 = vmatpush1.msra.mxu0 %v96
    %387 = vmatprep.subr.mxu0 %v95
    %388 = vmatpush1.msra.mxu0 %v94
    %389 = vmatprep.subr.mxu0 %v93
    %390 = vmatpush1.msra.mxu0 %v92
    %391 = vmatprep.subr.mxu0 %v91
    %392 = vmatpush1.msra.mxu0 %v90
    %393 = vmatprep.subr.mxu0 %v89
    %394 = vmatpush1.msra.mxu0 %v88
    %395 = vmatprep.subr.mxu0 %v87
    %396 = vmatpush1.msra.mxu0 %v86
    %397 = vmatprep.subr.mxu0 %v149
    %398 = vmatpush2.msra.mxu0 %v148
    %399 = vmatprep.subr.mxu0 %v147
    %400 = vmatpush2.msra.mxu0 %v146
    %401 = vmatprep.subr.mxu0 %v145
    %402 = vmatpush2.msra.mxu0 %v144
    %403 = vmatprep.subr.mxu0 %v143
    %404 = vmatpush2.msra.mxu0 %v142
    %405 = vmatprep.subr.mxu0 %v141
    %406 = vmatpush2.msra.mxu0 %v140
    %407 = vmatprep.subr.mxu0 %v139
    %408 = vmatpush2.msra.mxu0 %v138
    %409 = vmatprep.subr.mxu0 %v137
    %410 = vmatpush2.msra.mxu0 %v136
    %411 = vmatprep.subr.mxu0 %v135
    %412 = vmatpush2.msra.mxu0 %v134
    %413 = vmatprep.subr.mxu0 %v133
    %414 = vmatpush2.msra.mxu0 %v132
    %415 = vmatprep.subr.mxu0 %v131
    %416 = vmatpush2.msra.mxu0 %v130
    %417 = vmatprep.subr.mxu0 %v129
    %418 = vmatpush2.msra.mxu0 %v128
    %419 = vmatprep.subr.mxu0 %v127
    %420 = vmatpush2.msra.mxu0 %v126
    %421 = vmatprep.subr.mxu0 %v125
    %422 = vmatpush2.msra.mxu0 %v124
    %423 = vmatprep.subr.mxu0 %v123
    %424 = vmatpush2.msra.mxu0 %v122
    %425 = vmatprep.subr.mxu0 %v121
    %426 = vmatpush2.msra.mxu0 %v120
    %427 = vmatprep.subr.mxu0 %v119
    %428 = vmatpush2.msra.mxu0 %v118
    %429 = vmatprep.mubr.f32.mxu0 %v263
    %430 = vmatmul.mubr.f32.gmra.mxu0 %v259
    %v431 = vpop.f32.mrf.mxu0
    %v432 = vadd.f32 %v361, %v431
    %v433 = vpop.f32.mrf.mxu0
    %v434 = vadd.f32 %v363, %v433
    %435 = vdwg.mxu0
    %436 = vmatprep.subr.mxu0 %v181
    %437 = vmatpush1.msra.mxu0 %v180
    %438 = vmatprep.subr.mxu0 %v179
    %439 = vmatpush1.msra.mxu0 %v178
    %440 = vmatprep.subr.mxu0 %v177
    %441 = vmatpush1.msra.mxu0 %v176
    %442 = vmatprep.subr.mxu0 %v175
    %443 = vmatpush1.msra.mxu0 %v174
    %444 = vmatprep.subr.mxu0 %v173
    %445 = vmatpush1.msra.mxu0 %v172
    %446 = vmatprep.subr.mxu0 %v171
    %447 = vmatpush1.msra.mxu0 %v170
    %448 = vmatprep.subr.mxu0 %v169
    %449 = vmatpush1.msra.mxu0 %v168
    %450 = vmatprep.subr.mxu0 %v167
    %451 = vmatpush1.msra.mxu0 %v166
    %452 = vmatprep.subr.mxu0 %v165
    %453 = vmatpush1.msra.mxu0 %v164
    %454 = vmatprep.subr.mxu0 %v163
    %455 = vmatpush1.msra.mxu0 %v162
    %456 = vmatprep.subr.mxu0 %v161
    %457 = vmatpush1.msra.mxu0 %v160
    %458 = vmatprep.subr.mxu0 %v159
    %459 = vmatpush1.msra.mxu0 %v158
    %460 = vmatprep.subr.mxu0 %v157
    %461 = vmatpush1.msra.mxu0 %v156
    %462 = vmatprep.subr.mxu0 %v155
    %463 = vmatpush1.msra.mxu0 %v154
    %464 = vmatprep.subr.mxu0 %v153
    %465 = vmatpush1.msra.mxu0 %v152
    %466 = vmatprep.subr.mxu0 %v151
    %467 = vmatpush1.msra.mxu0 %v150
    %468 = vmatprep.subr.mxu0 %v213
    %469 = vmatpush2.msra.mxu0 %v212
    %470 = vmatprep.subr.mxu0 %v211
    %471 = vmatpush2.msra.mxu0 %v210
    %472 = vmatprep.subr.mxu0 %v209
    %473 = vmatpush2.msra.mxu0 %v208
    %474 = vmatprep.subr.mxu0 %v207
    %475 = vmatpush2.msra.mxu0 %v206
    %476 = vmatprep.subr.mxu0 %v205
    %477 = vmatpush2.msra.mxu0 %v204
    %478 = vmatprep.subr.mxu0 %v203
    %479 = vmatpush2.msra.mxu0 %v202
    %480 = vmatprep.subr.mxu0 %v201
    %481 = vmatpush2.msra.mxu0 %v200
    %482 = vmatprep.subr.mxu0 %v199
    %483 = vmatpush2.msra.mxu0 %v198
    %484 = vmatprep.subr.mxu0 %v197
    %485 = vmatpush2.msra.mxu0 %v196
    %486 = vmatprep.subr.mxu0 %v195
    %487 = vmatpush2.msra.mxu0 %v194
    %488 = vmatprep.subr.mxu0 %v193
    %489 = vmatpush2.msra.mxu0 %v192
    %490 = vmatprep.subr.mxu0 %v191
    %491 = vmatpush2.msra.mxu0 %v190
    %492 = vmatprep.subr.mxu0 %v189
    %493 = vmatpush2.msra.mxu0 %v188
    %494 = vmatprep.subr.mxu0 %v187
    %495 = vmatpush2.msra.mxu0 %v186
    %496 = vmatprep.subr.mxu0 %v185
    %497 = vmatpush2.msra.mxu0 %v184
    %498 = vmatprep.subr.mxu0 %v183
    %499 = vmatpush2.msra.mxu0 %v182
    %500 = vmatprep.mubr.f32.mxu0 %v271
    %501 = vmatmul.mubr.f32.gmra.mxu0 %v267
    %v502 = vpop.f32.mrf.mxu0
    %v503 = vadd.f32 %v432, %v502
    %v504 = vpop.f32.mrf.mxu0
    %v505 = vadd.f32 %v434, %v504
    %506 = vdwg.mxu0
    %507 = vmatprep.subr.mxu0 %v245
    %508 = vmatpush1.msra.mxu0 %v244
    %509 = vmatprep.subr.mxu0 %v243
    %510 = vmatpush1.msra.mxu0 %v242
    %511 = vmatprep.subr.mxu0 %v241
    %512 = vmatpush1.msra.mxu0 %v240
    %513 = vmatprep.subr.mxu0 %v239
    %514 = vmatpush1.msra.mxu0 %v238
    %515 = vmatprep.subr.mxu0 %v237
    %516 = vmatpush1.msra.mxu0 %v236
    %517 = vmatprep.subr.mxu0 %v235
    %518 = vmatpush1.msra.mxu0 %v234
    %519 = vmatprep.subr.mxu0 %v233
    %520 = vmatpush1.msra.mxu0 %v232
    %521 = vmatprep.subr.mxu0 %v231
    %522 = vmatpush1.msra.mxu0 %v230
    %523 = vmatprep.subr.mxu0 %v229
    %524 = vmatpush1.msra.mxu0 %v228
    %525 = vmatprep.subr.mxu0 %v227
    %526 = vmatpush1.msra.mxu0 %v226
    %527 = vmatprep.subr.mxu0 %v225
    %528 = vmatpush1.msra.mxu0 %v224
    %529 = vmatprep.subr.mxu0 %v223
    %530 = vmatpush1.msra.mxu0 %v222
    %531 = vmatprep.subr.mxu0 %v221
    %532 = vmatpush1.msra.mxu0 %v220
    %533 = vmatprep.subr.mxu0 %v219
    %534 = vmatpush1.msra.mxu0 %v218
    %535 = vmatprep.subr.mxu0 %v217
    %536 = vmatpush1.msra.mxu0 %v216
    %537 = vmatprep.subr.mxu0 %v215
    %538 = vmatpush1.msra.mxu0 %v214
    %539 = vmatprep.subr.mxu0 0.0
    %540 = vmatpush2.msra.mxu0 0.0
    %541 = vmatprep.subr.mxu0 0.0
    %542 = vmatpush2.msra.mxu0 0.0
    %543 = vmatprep.subr.mxu0 0.0
    %544 = vmatpush2.msra.mxu0 0.0
    %545 = vmatprep.subr.mxu0 0.0
    %546 = vmatpush2.msra.mxu0 0.0
    %547 = vmatprep.subr.mxu0 0.0
    %548 = vmatpush2.msra.mxu0 0.0
    %549 = vmatprep.subr.mxu0 0.0
    %550 = vmatpush2.msra.mxu0 0.0
    %551 = vmatprep.subr.mxu0 0.0
    %552 = vmatpush2.msra.mxu0 0.0
    %553 = vmatprep.subr.mxu0 0.0
    %554 = vmatpush2.msra.mxu0 0.0
    %555 = vmatprep.subr.mxu0 0.0
    %556 = vmatpush2.msra.mxu0 0.0
    %557 = vmatprep.subr.mxu0 0.0
    %558 = vmatpush2.msra.mxu0 0.0
    %559 = vmatprep.subr.mxu0 0.0
    %560 = vmatpush2.msra.mxu0 0.0
    %561 = vmatprep.subr.mxu0 0.0
    %562 = vmatpush2.msra.mxu0 0.0
    %563 = vmatprep.subr.mxu0 0.0
    %564 = vmatpush2.msra.mxu0 0.0
    %565 = vmatprep.subr.mxu0 0.0
    %566 = vmatpush2.msra.mxu0 0.0
    %567 = vmatprep.subr.mxu0 0.0
    %568 = vmatpush2.msra.mxu0 0.0
    %569 = vmatprep.subr.mxu0 0.0
    %570 = vmatpush2.msra.mxu0 0.0
    %571 = vmatprep.mubr.f32.mxu0 0.0
    %572 = vmatmul.mubr.f32.gmra.mxu0 %v275
    %v573 = vpop.f32.mrf.mxu0
    %v574 = vadd.f32 %v503, %v573
    %v575 = vpop.f32.mrf.mxu0
    %v576 = vadd.f32 %v505, %v575
    %577 = vdwg.mxu0
    %v578 = vmax.f32 %v574, 0.0
    %v579 = vmax.f32 %v576, 0.0
    %v580 = vld [vmem:[%s3] sm:$0xff]
    %v581 = vld [vmem:[%s3 + $0x8] sm:$0xff]
    %v582 = vld [vmem:[%s3 + $0x10] sm:$0xff]
    %v583 = vld [vmem:[%s3 + $0x18] sm:$0xff]
    %v584 = vld [vmem:[%s3 + $0x20] sm:$0xff]
    %v585 = vld [vmem:[%s3 + $0x28] sm:$0xff]
    %v586 = vld [vmem:[%s3 + $0x30] sm:$0xff]
    %v587 = vld [vmem:[%s3 + $0x38] sm:$0xff]
    %v588 = vld [vmem:[%s3 + $0x40] sm:$0xff]
    %v589 = vld [vmem:[%s3 + $0x48] sm:$0xff]
    %v590 = vld [vmem:[%s3 + $0x50] sm:$0xff]
    %v591 = vld [vmem:[%s3 + $0x58] sm:$0xff]
    %v592 = vld [vmem:[%s3 + $0x60] sm:$0xff]
    %v593 = vld [vmem:[%s3 + $0x68] sm:$0xff]
    %v594 = vld [vmem:[%s3 + $0x70] sm:$0xff]
    %v595 = vld [vmem:[%s3 + $0x78] sm:$0xff]
    %v596 = vld [vmem:[%s3 + $0x80] sm:$0xff]
    %v597 = vld [vmem:[%s3 + $0x88] sm:$0xff]
    %v598 = vld [vmem:[%s3 + $0x90] sm:$0xff]
    %v599 = vld [vmem:[%s3 + $0x98] sm:$0xff]
    %v600 = vld [vmem:[%s3 + $0xa0] sm:$0xff]
    %v601 = vld [vmem:[%s3 + $0xa8] sm:$0xff]
    %v602 = vld [vmem:[%s3 + $0xb0] sm:$0xff]
    %v603 = vld [vmem:[%s3 + $0xb8] sm:$0xff]
    %v604 = vld [vmem:[%s3 + $0xc0] sm:$0xff]
    %v605 = vld [vmem:[%s3 + $0xc8] sm:$0xff]
    %v606 = vld [vmem:[%s3 + $0xd0] sm:$0xff]
    %v607 = vld [vmem:[%s3 + $0xd8] sm:$0xff]
    %v608 = vld [vmem:[%s3 + $0xe0] sm:$0xff]
    %v609 = vld [vmem:[%s3 + $0xe8] sm:$0xff]
    %v610 = vld [vmem:[%s3 + $0xf0] sm:$0xff]
    %v611 = vld [vmem:[%s3 + $0xf8] sm:$0xff]
    %v612 = vld [vmem:[%s3 + $0x100] sm:$0xff]
    %v613 = vld [vmem:[%s3 + $0x108] sm:$0xff]
    %v614 = vld [vmem:[%s3 + $0x110] sm:$0xff]
    %v615 = vld [vmem:[%s3 + $0x118] sm:$0xff]
    %v616 = vld [vmem:[%s3 + $0x120] sm:$0xff]
    %v617 = vld [vmem:[%s3 + $0x128] sm:$0xff]
    %v618 = vld [vmem:[%s3 + $0x130] sm:$0xff]
    %v619 = vld [vmem:[%s3 + $0x138] sm:$0xff]
    %v620 = vld [vmem:[%s3 + $0x140] sm:$0xff]
    %v621 = vld [vmem:[%s3 + $0x148] sm:$0xff]
    %v622 = vld [vmem:[%s3 + $0x150] sm:$0xff]
    %v623 = vld [vmem:[%s3 + $0x158] sm:$0xff]
    %v624 = vld [vmem:[%s3 + $0x160] sm:$0xff]
    %v625 = vld [vmem:[%s3 + $0x168] sm:$0xff]
    %v626 = vld [vmem:[%s3 + $0x170] sm:$0xff]
    %v627 = vld [vmem:[%s3 + $0x178] sm:$0xff]
    %v628 = vld [vmem:[%s3 + $0x180] sm:$0xff]
    %v629 = vld [vmem:[%s3 + $0x188] sm:$0xff]
    %v630 = vld [vmem:[%s3 + $0x190] sm:$0xff]
    %v631 = vld [vmem:[%s3 + $0x198] sm:$0xff]
    %v632 = vld [vmem:[%s3 + $0x1a0] sm:$0xff]
    %v633 = vld [vmem:[%s3 + $0x1a8] sm:$0xff]
    %v634 = vld [vmem:[%s3 + $0x1b0] sm:$0xff]
    %v635 = vld [vmem:[%s3 + $0x1b8] sm:$0xff]
    %v636 = vld [vmem:[%s3 + $0x1c0] sm:$0xff]
    %v637 = vld [vmem:[%s3 + $0x1c8] sm:$0xff]
    %v638 = vld [vmem:[%s3 + $0x1d0] sm:$0xff]
    %v639 = vld [vmem:[%s3 + $0x1d8] sm:$0xff]
    %v640 = vld [vmem:[%s3 + $0x1e0] sm:$0xff]
    %v641 = vld [vmem:[%s3 + $0x1e8] sm:$0xff]
    %v642 = vld [vmem:[%s3 + $0x1f0] sm:$0xff]
    %v643 = vld [vmem:[%s3 + $0x1f8] sm:$0xff]
    %v644 = vld [vmem:[%s3 + $0x200] sm:$0xff]
    %v645 = vld [vmem:[%s3 + $0x208] sm:$0xff]
    %v646 = vld [vmem:[%s3 + $0x210] sm:$0xff]
    %v647 = vld [vmem:[%s3 + $0x218] sm:$0xff]
    %v648 = vld [vmem:[%s3 + $0x220] sm:$0xff]
    %v649 = vld [vmem:[%s3 + $0x228] sm:$0xff]
    %v650 = vld [vmem:[%s3 + $0x230] sm:$0xff]
    %v651 = vld [vmem:[%s3 + $0x238] sm:$0xff]
    %v652 = vld [vmem:[%s3 + $0x240] sm:$0xff]
    %v653 = vld [vmem:[%s3 + $0x248] sm:$0xff]
    %v654 = vld [vmem:[%s3 + $0x250] sm:$0xff]
    %v655 = vld [vmem:[%s3 + $0x258] sm:$0xff]
    %v656 = vld [vmem:[%s3 + $0x260] sm:$0xff]
    %v657 = vld [vmem:[%s3 + $0x268] sm:$0xff]
    %v658 = vld [vmem:[%s3 + $0x270] sm:$0xff]
    %v659 = vld [vmem:[%s3 + $0x278] sm:$0xff]
    %v660 = vld [vmem:[%s3 + $0x280] sm:$0xff]
    %v661 = vld [vmem:[%s3 + $0x288] sm:$0xff]
    %v662 = vld [vmem:[%s3 + $0x290] sm:$0xff]
    %v663 = vld [vmem:[%s3 + $0x298] sm:$0xff]
    %v664 = vld [vmem:[%s3 + $0x2a0] sm:$0xff]
    %v665 = vld [vmem:[%s3 + $0x2a8] sm:$0xff]
    %v666 = vld [vmem:[%s3 + $0x2b0] sm:$0xff]
    %v667 = vld [vmem:[%s3 + $0x2b8] sm:$0xff]
    %v668 = vld [vmem:[%s3 + $0x2c0] sm:$0xff]
    %v669 = vld [vmem:[%s3 + $0x2c8] sm:$0xff]
    %v670 = vld [vmem:[%s3 + $0x2d0] sm:$0xff]
    %v671 = vld [vmem:[%s3 + $0x2d8] sm:$0xff]
    %v672 = vld [vmem:[%s3 + $0x2e0] sm:$0xff]
    %v673 = vld [vmem:[%s3 + $0x2e8] sm:$0xff]
    %v674 = vld [vmem:[%s3 + $0x2f0] sm:$0xff]
    %v675 = vld [vmem:[%s3 + $0x2f8] sm:$0xff]
    %v676 = vld [vmem:[%s3 + $0x300] sm:$0xff]
    %v677 = vld [vmem:[%s3 + $0x308] sm:$0xff]
    %v678 = vld [vmem:[%s3 + $0x310] sm:$0xff]
    %v679 = vld [vmem:[%s3 + $0x318] sm:$0xff]
    %v680 = vld [vmem:[%s3 + $0x320] sm:$0xff]
    %v681 = vld [vmem:[%s3 + $0x328] sm:$0xff]
    %v682 = vld [vmem:[%s3 + $0x330] sm:$0xff]
    %v683 = vld [vmem:[%s3 + $0x338] sm:$0xff]
    %v684 = vld [vmem:[%s3 + $0x340] sm:$0xff]
    %v685 = vld [vmem:[%s3 + $0x348] sm:$0xff]
    %v686 = vld [vmem:[%s3 + $0x350] sm:$0xff]
    %v687 = vld [vmem:[%s3 + $0x358] sm:$0xff]
    %v688 = vld [vmem:[%s3 + $0x360] sm:$0xff]
    %v689 = vld [vmem:[%s3 + $0x368] sm:$0xff]
    %v690 = vld [vmem:[%s3 + $0x370] sm:$0xff]
    %v691 = vld [vmem:[%s3 + $0x378] sm:$0xff]
    %v692 = vld [vmem:[%s3 + $0x380] sm:$0xff]
    %v693 = vld [vmem:[%s3 + $0x388] sm:$0xff]
    %v694 = vld [vmem:[%s3 + $0x390] sm:$0xff]
    %v695 = vld [vmem:[%s3 + $0x398] sm:$0xff]
    %v696 = vld [vmem:[%s3 + $0x3a0] sm:$0xff]
    %v697 = vld [vmem:[%s3 + $0x3a8] sm:$0xff]
    %v698 = vld [vmem:[%s3 + $0x3b0] sm:$0xff]
    %v699 = vld [vmem:[%s3 + $0x3b8] sm:$0xff]
    %v700 = vld [vmem:[%s3 + $0x3c0] sm:$0xff]
    %v701 = vld [vmem:[%s3 + $0x3c8] sm:$0xff]
    %v702 = vld [vmem:[%s3 + $0x3d0] sm:$0xff]
    %v703 = vld [vmem:[%s3 + $0x3d8] sm:$0xff]
    %v704 = vld [vmem:[%s3 + $0x3e0] sm:$0xff]
    %v705 = vld [vmem:[%s3 + $0x3e8] sm:$0xff]
    %v706 = vld [vmem:[%s3 + $0x3f0] sm:$0xff]
    %v707 = vld [vmem:[%s3 + $0x3f8] sm:$0xff]
    %v708 = vld [vmem:[%s3 + $0x400] sm:$0xff]
    %v709 = vld [vmem:[%s3 + $0x408] sm:$0xff]
    %v710 = vld [vmem:[%s3 + $0x410] sm:$0xff]
    %v711 = vld [vmem:[%s3 + $0x418] sm:$0xff]
    %v712 = vld [vmem:[%s3 + $0x420] sm:$0xff]
    %v713 = vld [vmem:[%s3 + $0x428] sm:$0xff]
    %v714 = vld [vmem:[%s3 + $0x430] sm:$0xff]
    %v715 = vld [vmem:[%s3 + $0x438] sm:$0xff]
    %v716 = vld [vmem:[%s3 + $0x440] sm:$0xff]
    %v717 = vld [vmem:[%s3 + $0x448] sm:$0xff]
    %v718 = vld [vmem:[%s3 + $0x450] sm:$0xff]
    %v719 = vld [vmem:[%s3 + $0x458] sm:$0xff]
    %v720 = vld [vmem:[%s3 + $0x460] sm:$0xff]
    %v721 = vld [vmem:[%s3 + $0x468] sm:$0xff]
    %v722 = vld [vmem:[%s3 + $0x470] sm:$0xff]
    %v723 = vld [vmem:[%s3 + $0x478] sm:$0xff]
    %v724 = vld [vmem:[%s3 + $0x480] sm:$0xff]
    %v725 = vld [vmem:[%s3 + $0x488] sm:$0xff]
    %v726 = vld [vmem:[%s3 + $0x490] sm:$0xff]
    %v727 = vld [vmem:[%s3 + $0x498] sm:$0xff]
    %v728 = vld [vmem:[%s3 + $0x4a0] sm:$0xff]
    %v729 = vld [vmem:[%s3 + $0x4a8] sm:$0xff]
    %v730 = vld [vmem:[%s3 + $0x4b0] sm:$0xff]
    %v731 = vld [vmem:[%s3 + $0x4b8] sm:$0xff]
    %v732 = vld [vmem:[%s3 + $0x4c0] sm:$0xff]
    %v733 = vld [vmem:[%s3 + $0x4c8] sm:$0xff]
    %v734 = vld [vmem:[%s3 + $0x4d0] sm:$0xff]
    %v735 = vld [vmem:[%s3 + $0x4d8] sm:$0xff]
    %v736 = vld [vmem:[%s3 + $0x4e0] sm:$0xff]
    %v737 = vld [vmem:[%s3 + $0x4e8] sm:$0xff]
    %v738 = vld [vmem:[%s3 + $0x4f0] sm:$0xff]
    %v739 = vld [vmem:[%s3 + $0x4f8] sm:$0xff]
    %v740 = vld [vmem:[%s3 + $0x500] sm:$0xff]
    %v741 = vld [vmem:[%s3 + $0x508] sm:$0xff]
    %v742 = vld [vmem:[%s3 + $0x510] sm:$0xff]
    %v743 = vld [vmem:[%s3 + $0x518] sm:$0xff]
    %v744 = vld [vmem:[%s3 + $0x520] sm:$0xff]
    %v745 = vld [vmem:[%s3 + $0x528] sm:$0xff]
    %v746 = vld [vmem:[%s3 + $0x530] sm:$0xff]
    %v747 = vld [vmem:[%s3 + $0x538] sm:$0xff]
    %v748 = vld [vmem:[%s3 + $0x540] sm:$0xff]
    %v749 = vld [vmem:[%s3 + $0x548] sm:$0xff]
    %v750 = vld [vmem:[%s3 + $0x550] sm:$0xff]
    %v751 = vld [vmem:[%s3 + $0x558] sm:$0xff]
    %v752 = vld [vmem:[%s3 + $0x560] sm:$0xff]
    %v753 = vld [vmem:[%s3 + $0x568] sm:$0xff]
    %v754 = vld [vmem:[%s3 + $0x570] sm:$0xff]
    %v755 = vld [vmem:[%s3 + $0x578] sm:$0xff]
    %v756 = vld [vmem:[%s3 + $0x580] sm:$0xff]
    %v757 = vld [vmem:[%s3 + $0x588] sm:$0xff]
    %v758 = vld [vmem:[%s3 + $0x590] sm:$0xff]
    %v759 = vld [vmem:[%s3 + $0x598] sm:$0xff]
    %v760 = vld [vmem:[%s3 + $0x5a0] sm:$0xff]
    %v761 = vld [vmem:[%s3 + $0x5a8] sm:$0xff]
    %v762 = vld [vmem:[%s3 + $0x5b0] sm:$0xff]
    %v763 = vld [vmem:[%s3 + $0x5b8] sm:$0xff]
    %v764 = vld [vmem:[%s3 + $0x5c0] sm:$0xff]
    %v765 = vld [vmem:[%s3 + $0x5c8] sm:$0xff]
    %v766 = vld [vmem:[%s3 + $0x5d0] sm:$0xff]
    %v767 = vld [vmem:[%s3 + $0x5d8] sm:$0xff]
    %v768 = vld [vmem:[%s3 + $0x5e0] sm:$0xff]
    %v769 = vld [vmem:[%s3 + $0x5e8] sm:$0xff]
    %v770 = vld [vmem:[%s3 + $0x5f0] sm:$0xff]
    %v771 = vld [vmem:[%s3 + $0x5f8] sm:$0xff]
    %v772 = vld [vmem:[%s3 + $0x600] sm:$0xff]
    %v773 = vld [vmem:[%s3 + $0x608] sm:$0xff]
    %v774 = vld [vmem:[%s3 + $0x610] sm:$0xff]
    %v775 = vld [vmem:[%s3 + $0x618] sm:$0xff]
    %v776 = vld [vmem:[%s4] sm:$0xff]
    %v778 = vlaneseq
    %v779 = vshrl.u32 %v778, 7
    %v780 = vsub.s32 0, %v779
    %v781 = vrot.slane %v776, %v780
    %v782 = vlaneseq
    %v783 = vshrl.u32 %v782, 7
    %v784 = vsub.s32 1, %v783
    %v785 = vrot.slane %v776, %v784
    %v786 = vlaneseq
    %v787 = vshrl.u32 %v786, 7
    %v788 = vsub.s32 2, %v787
    %v789 = vrot.slane %v776, %v788
    %v790 = vlaneseq
    %v791 = vshrl.u32 %v790, 7
    %v792 = vsub.s32 3, %v791
    %v793 = vrot.slane %v776, %v792
    %v794 = vlaneseq
    %v795 = vshrl.u32 %v794, 7
    %v796 = vsub.s32 4, %v795
    %v797 = vrot.slane %v776, %v796
    %v798 = vlaneseq
    %v799 = vshrl.u32 %v798, 7
    %v800 = vsub.s32 5, %v799
    %v801 = vrot.slane %v776, %v800
    %v802 = vlaneseq
    %v803 = vshrl.u32 %v802, 7
    %v804 = vsub.s32 6, %v803
    %v805 = vrot.slane %v776, %v804
    %vm813 = vcmask 785408
    %v815 = vsel %vm813, %v579, 0
    %817 = vmatprep.subr.mxu0 %v686
    %818 = vmatpush1.msra.mxu0 %v685
    %819 = vmatprep.subr.mxu0 %v679
    %820 = vmatpush1.msra.mxu0 %v678
    %821 = vmatprep.subr.mxu0 %v672
    %822 = vmatpush1.msra.mxu0 %v671
    %823 = vmatprep.subr.mxu0 %v665
    %824 = vmatpush1.msra.mxu0 %v664
    %825 = vmatprep.subr.mxu0 %v658
    %826 = vmatpush1.msra.mxu0 %v657
    %827 = vmatprep.subr.mxu0 %v651
    %828 = vmatpush1.msra.mxu0 %v650
    %829 = vmatprep.subr.mxu0 %v644
    %830 = vmatpush1.msra.mxu0 %v643
    %831 = vmatprep.subr.mxu0 %v637
    %832 = vmatpush1.msra.mxu0 %v636
    %833 = vmatprep.subr.mxu0 %v630
    %834 = vmatpush1.msra.mxu0 %v629
    %835 = vmatprep.subr.mxu0 %v623
    %836 = vmatpush1.msra.mxu0 %v622
    %837 = vmatprep.subr.mxu0 %v616
    %838 = vmatpush1.msra.mxu0 %v615
    %839 = vmatprep.subr.mxu0 %v609
    %840 = vmatpush1.msra.mxu0 %v608
    %841 = vmatprep.subr.mxu0 %v602
    %842 = vmatpush1.msra.mxu0 %v601
    %843 = vmatprep.subr.mxu0 %v595
    %844 = vmatpush1.msra.mxu0 %v594
    %845 = vmatprep.subr.mxu0 %v588
    %846 = vmatpush1.msra.mxu0 %v587
    %847 = vmatprep.subr.mxu0 %v581
    %848 = vmatpush1.msra.mxu0 %v580
    %849 = vmatprep.subr.mxu0 0.0
    %850 = vmatpush2.msra.mxu0 0.0
    %851 = vmatprep.subr.mxu0 0.0
    %852 = vmatpush2.msra.mxu0 0.0
    %853 = vmatprep.subr.mxu0 0.0
    %854 = vmatpush2.msra.mxu0 0.0
    %855 = vmatprep.subr.mxu0 0.0
    %856 = vmatpush2.msra.mxu0 0.0
    %857 = vmatprep.subr.mxu0 %v770
    %858 = vmatpush2.msra.mxu0 %v769
    %859 = vmatprep.subr.mxu0 %v763
    %860 = vmatpush2.msra.mxu0 %v762
    %861 = vmatprep.subr.mxu0 %v756
    %862 = vmatpush2.msra.mxu0 %v755
    %863 = vmatprep.subr.mxu0 %v749
    %864 = vmatpush2.msra.mxu0 %v748
    %865 = vmatprep.subr.mxu0 %v742
    %866 = vmatpush2.msra.mxu0 %v741
    %867 = vmatprep.subr.mxu0 %v735
    %868 = vmatpush2.msra.mxu0 %v734
    %869 = vmatprep.subr.mxu0 %v728
    %870 = vmatpush2.msra.mxu0 %v727
    %871 = vmatprep.subr.mxu0 %v721
    %872 = vmatpush2.msra.mxu0 %v720
    %873 = vmatprep.subr.mxu0 %v714
    %874 = vmatpush2.msra.mxu0 %v713
    %875 = vmatprep.subr.mxu0 %v707
    %876 = vmatpush2.msra.mxu0 %v706
    %877 = vmatprep.subr.mxu0 %v700
    %878 = vmatpush2.msra.mxu0 %v699
    %879 = vmatprep.subr.mxu0 %v693
    %880 = vmatpush2.msra.mxu0 %v692
    %881 = vmatprep.mubr.f32.mxu0 %v815
    %882 = vmatmul.mubr.f32.gmra.mxu0 %v578
    %v883 = vpop.f32.mrf.mxu0
    %v884 = vadd.f32 %v781, %v883
    %v885 = vpop.f32.mrf.mxu0
    %v886 = vadd.f32 %v785, %v885
    %887 = vdwg.mxu0
    %888 = vmatprep.subr.mxu0 %v688
    %889 = vmatpush1.msra.mxu0 %v687
    %890 = vmatprep.subr.mxu0 %v681
    %891 = vmatpush1.msra.mxu0 %v680
    %892 = vmatprep.subr.mxu0 %v674
    %893 = vmatpush1.msra.mxu0 %v673
    %894 = vmatprep.subr.mxu0 %v667
    %895 = vmatpush1.msra.mxu0 %v666
    %896 = vmatprep.subr.mxu0 %v660
    %897 = vmatpush1.msra.mxu0 %v659
    %898 = vmatprep.subr.mxu0 %v653
    %899 = vmatpush1.msra.mxu0 %v652
    %900 = vmatprep.subr.mxu0 %v646
    %901 = vmatpush1.msra.mxu0 %v645
    %902 = vmatprep.subr.mxu0 %v639
    %903 = vmatpush1.msra.mxu0 %v638
    %904 = vmatprep.subr.mxu0 %v632
    %905 = vmatpush1.msra.mxu0 %v631
    %906 = vmatprep.subr.mxu0 %v625
    %907 = vmatpush1.msra.mxu0 %v624
    %908 = vmatprep.subr.mxu0 %v618
    %909 = vmatpush1.msra.mxu0 %v617
    %910 = vmatprep.subr.mxu0 %v611
    %911 = vmatpush1.msra.mxu0 %v610
    %912 = vmatprep.subr.mxu0 %v604
    %913 = vmatpush1.msra.mxu0 %v603
    %914 = vmatprep.subr.mxu0 %v597
    %915 = vmatpush1.msra.mxu0 %v596
    %916 = vmatprep.subr.mxu0 %v590
    %917 = vmatpush1.msra.mxu0 %v589
    %918 = vmatprep.subr.mxu0 %v583
    %919 = vmatpush1.msra.mxu0 %v582
    %920 = vmatprep.subr.mxu0 0.0
    %921 = vmatpush2.msra.mxu0 0.0
    %922 = vmatprep.subr.mxu0 0.0
    %923 = vmatpush2.msra.mxu0 0.0
    %924 = vmatprep.subr.mxu0 0.0
    %925 = vmatpush2.msra.mxu0 0.0
    %926 = vmatprep.subr.mxu0 0.0
    %927 = vmatpush2.msra.mxu0 0.0
    %928 = vmatprep.subr.mxu0 %v772
    %929 = vmatpush2.msra.mxu0 %v771
    %930 = vmatprep.subr.mxu0 %v765
    %931 = vmatpush2.msra.mxu0 %v764
    %932 = vmatprep.subr.mxu0 %v758
    %933 = vmatpush2.msra.mxu0 %v757
    %934 = vmatprep.subr.mxu0 %v751
    %935 = vmatpush2.msra.mxu0 %v750
    %936 = vmatprep.subr.mxu0 %v744
    %937 = vmatpush2.msra.mxu0 %v743
    %938 = vmatprep.subr.mxu0 %v737
    %939 = vmatpush2.msra.mxu0 %v736
    %940 = vmatprep.subr.mxu0 %v730
    %941 = vmatpush2.msra.mxu0 %v729
    %942 = vmatprep.subr.mxu0 %v723
    %943 = vmatpush2.msra.mxu0 %v722
    %944 = vmatprep.subr.mxu0 %v716
    %945 = vmatpush2.msra.mxu0 %v715
    %946 = vmatprep.subr.mxu0 %v709
    %947 = vmatpush2.msra.mxu0 %v708
    %948 = vmatprep.subr.mxu0 %v702
    %949 = vmatpush2.msra.mxu0 %v701
    %950 = vmatprep.subr.mxu0 %v695
    %951 = vmatpush2.msra.mxu0 %v694
    %952 = vmatprep.mubr.f32.mxu0 %v815
    %953 = vmatmul.mubr.f32.gmra.mxu0 %v578
    %v954 = vpop.f32.mrf.mxu0
    %v955 = vadd.f32 %v789, %v954
    %v956 = vpop.f32.mrf.mxu0
    %v957 = vadd.f32 %v793, %v956
    %958 = vdwg.mxu0
    %959 = vmatprep.subr.mxu0 %v690
    %960 = vmatpush1.msra.mxu0 %v689
    %961 = vmatprep.subr.mxu0 %v683
    %962 = vmatpush1.msra.mxu0 %v682
    %963 = vmatprep.subr.mxu0 %v676
    %964 = vmatpush1.msra.mxu0 %v675
    %965 = vmatprep.subr.mxu0 %v669
    %966 = vmatpush1.msra.mxu0 %v668
    %967 = vmatprep.subr.mxu0 %v662
    %968 = vmatpush1.msra.mxu0 %v661
    %969 = vmatprep.subr.mxu0 %v655
    %970 = vmatpush1.msra.mxu0 %v654
    %971 = vmatprep.subr.mxu0 %v648
    %972 = vmatpush1.msra.mxu0 %v647
    %973 = vmatprep.subr.mxu0 %v641
    %974 = vmatpush1.msra.mxu0 %v640
    %975 = vmatprep.subr.mxu0 %v634
    %976 = vmatpush1.msra.mxu0 %v633
    %977 = vmatprep.subr.mxu0 %v627
    %978 = vmatpush1.msra.mxu0 %v626
    %979 = vmatprep.subr.mxu0 %v620
    %980 = vmatpush1.msra.mxu0 %v619
    %981 = vmatprep.subr.mxu0 %v613
    %982 = vmatpush1.msra.mxu0 %v612
    %983 = vmatprep.subr.mxu0 %v606
    %984 = vmatpush1.msra.mxu0 %v605
    %985 = vmatprep.subr.mxu0 %v599
    %986 = vmatpush1.msra.mxu0 %v598
    %987 = vmatprep.subr.mxu0 %v592
    %988 = vmatpush1.msra.mxu0 %v591
    %989 = vmatprep.subr.mxu0 %v585
    %990 = vmatpush1.msra.mxu0 %v584
    %991 = vmatprep.subr.mxu0 0.0
    %992 = vmatpush2.msra.mxu0 0.0
    %993 = vmatprep.subr.mxu0 0.0
    %994 = vmatpush2.msra.mxu0 0.0
    %995 = vmatprep.subr.mxu0 0.0
    %996 = vmatpush2.msra.mxu0 0.0
    %997 = vmatprep.subr.mxu0 0.0
    %998 = vmatpush2.msra.mxu0 0.0
    %999 = vmatprep.subr.mxu0 %v774
    %1000 = vmatpush2.msra.mxu0 %v773
    %1001 = vmatprep.subr.mxu0 %v767
    %1002 = vmatpush2.msra.mxu0 %v766
    %1003 = vmatprep.subr.mxu0 %v760
    %1004 = vmatpush2.msra.mxu0 %v759
    %1005 = vmatprep.subr.mxu0 %v753
    %1006 = vmatpush2.msra.mxu0 %v752
    %1007 = vmatprep.subr.mxu0 %v746
    %1008 = vmatpush2.msra.mxu0 %v745
    %1009 = vmatprep.subr.mxu0 %v739
    %1010 = vmatpush2.msra.mxu0 %v738
    %1011 = vmatprep.subr.mxu0 %v732
    %1012 = vmatpush2.msra.mxu0 %v731
    %1013 = vmatprep.subr.mxu0 %v725
    %1014 = vmatpush2.msra.mxu0 %v724
    %1015 = vmatprep.subr.mxu0 %v718
    %1016 = vmatpush2.msra.mxu0 %v717
    %1017 = vmatprep.subr.mxu0 %v711
    %1018 = vmatpush2.msra.mxu0 %v710
    %1019 = vmatprep.subr.mxu0 %v704
    %1020 = vmatpush2.msra.mxu0 %v703
    %1021 = vmatprep.subr.mxu0 %v697
    %1022 = vmatpush2.msra.mxu0 %v696
    %1023 = vmatprep.mubr.f32.mxu0 %v815
    %1024 = vmatmul.mubr.f32.gmra.mxu0 %v578
    %v1025 = vpop.f32.mrf.mxu0
    %v1026 = vadd.f32 %v797, %v1025
    %v1027 = vpop.f32.mrf.mxu0
    %v1028 = vadd.f32 %v801, %v1027
    %1029 = vdwg.mxu0
    %1030 = vmatprep.subr.mxu0 0.0
    %1031 = vmatpush1.msra.mxu0 %v691
    %1032 = vmatprep.subr.mxu0 0.0
    %1033 = vmatpush1.msra.mxu0 %v684
    %1034 = vmatprep.subr.mxu0 0.0
    %1035 = vmatpush1.msra.mxu0 %v677
    %1036 = vmatprep.subr.mxu0 0.0
    %1037 = vmatpush1.msra.mxu0 %v670
    %1038 = vmatprep.subr.mxu0 0.0
    %1039 = vmatpush1.msra.mxu0 %v663
    %1040 = vmatprep.subr.mxu0 0.0
    %1041 = vmatpush1.msra.mxu0 %v656
    %1042 = vmatprep.subr.mxu0 0.0
    %1043 = vmatpush1.msra.mxu0 %v649
    %1044 = vmatprep.subr.mxu0 0.0
    %1045 = vmatpush1.msra.mxu0 %v642
    %1046 = vmatprep.subr.mxu0 0.0
    %1047 = vmatpush1.msra.mxu0 %v635
    %1048 = vmatprep.subr.mxu0 0.0
    %1049 = vmatpush1.msra.mxu0 %v628
    %1050 = vmatprep.subr.mxu0 0.0
    %1051 = vmatpush1.msra.mxu0 %v621
    %1052 = vmatprep.subr.mxu0 0.0
    %1053 = vmatpush1.msra.mxu0 %v614
    %1054 = vmatprep.subr.mxu0 0.0
    %1055 = vmatpush1.msra.mxu0 %v607
    %1056 = vmatprep.subr.mxu0 0.0
    %1057 = vmatpush1.msra.mxu0 %v600
    %1058 = vmatprep.subr.mxu0 0.0
    %1059 = vmatpush1.msra.mxu0 %v593
    %1060 = vmatprep.subr.mxu0 0.0
    %1061 = vmatpush1.msra.mxu0 %v586
    %1062 = vmatprep.subr.mxu0 0.0
    %1063 = vmatpush2.msra.mxu0 0.0
    %1064 = vmatprep.subr.mxu0 0.0
    %1065 = vmatpush2.msra.mxu0 0.0
    %1066 = vmatprep.subr.mxu0 0.0
    %1067 = vmatpush2.msra.mxu0 0.0
    %1068 = vmatprep.subr.mxu0 0.0
    %1069 = vmatpush2.msra.mxu0 0.0
    %1070 = vmatprep.subr.mxu0 0.0
    %1071 = vmatpush2.msra.mxu0 %v775
    %1072 = vmatprep.subr.mxu0 0.0
    %1073 = vmatpush2.msra.mxu0 %v768
    %1074 = vmatprep.subr.mxu0 0.0
    %1075 = vmatpush2.msra.mxu0 %v761
    %1076 = vmatprep.subr.mxu0 0.0
    %1077 = vmatpush2.msra.mxu0 %v754
    %1078 = vmatprep.subr.mxu0 0.0
    %1079 = vmatpush2.msra.mxu0 %v747
    %1080 = vmatprep.subr.mxu0 0.0
    %1081 = vmatpush2.msra.mxu0 %v740
    %1082 = vmatprep.subr.mxu0 0.0
    %1083 = vmatpush2.msra.mxu0 %v733
    %1084 = vmatprep.subr.mxu0 0.0
    %1085 = vmatpush2.msra.mxu0 %v726
    %1086 = vmatprep.subr.mxu0 0.0
    %1087 = vmatpush2.msra.mxu0 %v719
    %1088 = vmatprep.subr.mxu0 0.0
    %1089 = vmatpush2.msra.mxu0 %v712
    %1090 = vmatprep.subr.mxu0 0.0
    %1091 = vmatpush2.msra.mxu0 %v705
    %1092 = vmatprep.subr.mxu0 0.0
    %1093 = vmatpush2.msra.mxu0 %v698
    %1094 = vmatprep.mubr.f32.mxu0 %v815
    %1095 = vmatmul.mubr.f32.gmra.mxu0 %v578
    %v1096 = vpop.f32.mrf.mxu0
    %v1097 = vadd.f32 %v805, %v1096
    %v1098 = vpop.f32.mrf.mxu0
    %1099 = vdwg.mxu0
    %v1107 = vcombine.low %v884, %v886
    %v1108 = vcombine.low %v955, %v957
    %v1109 = vcombine.low %v1026, %v1028
    %v1111 = vunpack.c.l.s4 1966171168
    %v1112 = vunpack.c.0.s8 %v1111
    %v1113 = vlaneseq
    %v1114 = vshrl.u32 %v1113, 7
    %v1115 = vsub.s32 %v1112, %v1114
    %v1116 = vrot.slane %v1107, %v1115
    %v1118 = vunpack.c.l.s4 1966171168
    %v1119 = vunpack.c.0.s8 %v1118
    %v1120 = vlaneseq
    %v1121 = vshrl.u32 %v1120, 7
    %v1122 = vsub.s32 %v1119, %v1121
    %v1123 = vrot.slane %v1108, %v1122
    %v1125 = vunpack.c.l.s4 1966171168
    %v1126 = vunpack.c.0.s8 %v1125
    %v1127 = vlaneseq
    %v1128 = vshrl.u32 %v1127, 7
    %v1129 = vsub.s32 %v1126, %v1128
    %v1130 = vrot.slane %v1109, %v1129
    %v1132 = vunpack.c.l.s4 1966171168
    %v1133 = vunpack.c.0.s8 %v1132
    %v1134 = vlaneseq
    %v1135 = vshrl.u32 %v1134, 7
    %v1136 = vsub.s32 %v1133, %v1135
    %v1137 = vrot.slane %v1097, %v1136
    %v1138 = vcombine.low %v1116, %v1123
    %v1139 = vcombine.low %v1130, %v1137
    %v1141 = vunpack.c.l.s4 1966171168
    %v1142 = vunpack.c.0.s8 %v1141
    %v1143 = vlaneseq
    %v1144 = vshrl.u32 %v1143, 7
    %v1145 = vsub.s32 %v1142, %v1144
    %v1146 = vrot.slane %v1138, %v1145
    %v1148 = vunpack.c.l.s4 1966171168
    %v1149 = vunpack.c.0.s8 %v1148
    %v1150 = vlaneseq
    %v1151 = vshrl.u32 %v1150, 7
    %v1152 = vsub.s32 %v1149, %v1151
    %v1153 = vrot.slane %v1139, %v1152
    %v1154 = vcombine.low %v1146, %v1153
    %v1156 = vlaneseq
    %vm1157 = vcmp.ge.s32.totalorder %v1156, 0
    %vm1158 = vcmp.lt.s32.totalorder %v1156, 896
    %vm1159 = vmand %vm1157, %vm1158
    %1160 = vst.msk [vmem:[#allocation2] sm:$0x7f] %vm1159, %v1154
    // Predicated region
    $region22: #{tpu_custom_call.1} parent=1 // pred_check
      _
    $region23: #{tpu_custom_call.1} parent=1 // pred_check_branch
      %1162 = sbr.rel (0) target = $region25
    $region24: #{tpu_custom_call.1} parent=1 // pred_region
      %s1164 = ssub.s32 112, 112
      %1165 = vsyncadd [#allocation3], %s1164
      %s1167 = sshll.u32 [#allocation2], 4
      %s1168 = int_to_ptr.vmem [resolvable:$true] %s1167
      %1170 = dma.vmem_to_hbm [thread:$0]  %s1168, 112, %s5, [#allocation3]
    $region25: #{tpu_custom_call.1} parent=1 // pred_fallthru
      _
    // Predicated region
    $region26: #{tpu_custom_call.1} parent=1 // pred_check
      _
    $region27: #{tpu_custom_call.1} parent=1 // pred_check_branch
      %1172 = sbr.rel (0) target = $region29
    $region28: #{tpu_custom_call.1} parent=1 // pred_region
      %1173 = dma.done [#allocation3], 112
    $region29: #{tpu_custom_call.1} parent=1 // pred_fallthru
      _
    %1174 = vsyncpa [#allocation3], 1

</llo_original>
